<compile_context>
chip_gen: v6e
topology: v6e:2x2x1
jax: 0.10.0
libtpu: 0.0.40
codegen_flags: <defaults>
</compile_context>

<pallas_src>
import functools

import jax
import jax.numpy as jnp
from jax.experimental import pallas as pl
from jax.experimental.pallas import tpu as pltpu


# ------------------------------ kernel ---------------------------------------
def _polygon_encoder_kernel(n_conv_layers, n_points, dim_latent,
                            points_ref, exists_ref, *refs):
    """refs = (w0, [w_rest], b_conv, w_head, b_head, out_ref).

    points_ref : [bn, 2*P]   raw points, point-major / xy-minor, f32
    exists_ref : [bn, 1]     f32 mask
    w0         : [2*P, P*D]  block-circulant layer-0 weight (bf16 or f32)
    w_rest     : [L-1, P*D, P*D] block-circulant weights for layers >= 1
    b_conv     : [L, 1, P*D] per-layer bias tiled over points (f32)
    w_head     : [P*D, D]    tile(W_out.T, (P,1))  -> fused point-sum + Linear
    b_head     : [1, D]      Linear bias (f32)
    """
    out_ref = refs[-1]
    if n_conv_layers > 1:
        w0_ref, w_rest_ref, b_conv_ref, w_head_ref, b_head_ref = refs[:-1]
    else:
        w0_ref, b_conv_ref, w_head_ref, b_head_ref = refs[:-1]
        w_rest_ref = None

    # Layer 0: raw points [bn, 2P] x block-circulant weight [2P, P*D] (one MXU
    # matmul; circular padding + im2col are folded into the weight).
    w0 = w0_ref[...]
    y = jnp.dot(points_ref[...].astype(w0.dtype), w0,
                preferred_element_type=jnp.float32)
    y = y + b_conv_ref[0]                       # [1, P*D] f32 bias
    h = jnp.maximum(y, 0.01 * y)                # F.leaky_relu(0.01), lane-dense

    # Layers >= 1: one [bn, P*D] @ [P*D, P*D] MXU matmul each.
    for l in range(1, n_conv_layers):
        w = w_rest_ref[l - 1]
        y = jnp.dot(h.astype(w.dtype), w, preferred_element_type=jnp.float32)
        y = y + b_conv_ref[l]
        h = jnp.maximum(y, 0.01 * y)

    # Fused point-sum + output Linear:
    #   sum_p h[:, p*D:(p+1)*D] @ W_out.T  ==  h @ tile(W_out.T, (P, 1))
    # The per-row exists scalar commutes past the dot; bias is added after the
    # mask, exactly matching the PyTorch module.
    w_head = w_head_ref[...]
    out = jnp.dot(h.astype(w_head.dtype), w_head,
                  preferred_element_type=jnp.float32)
    out = out * exists_ref[...] + b_head_ref[...]
    out_ref[...] = out.astype(out_ref.dtype)


# --------------------------- wrapper helpers ---------------------------------
def _round_up(x, m):
    return -(-x // m) * m


def _pack_circulant(w, n_points):
    """PyTorch Conv1d weight [D_out, C_in, K] (padding='same', circular) ->
    block-circulant matrix [P*C_in, P*D_out] acting on point-major /
    channel-minor flattened activations."""
    d_out, c_in, K = w.shape
    P = n_points
    pad = (K - 1) // 2                       # PyTorch 'same' left pad
    wc = jnp.zeros((P, c_in, P, d_out), jnp.float32)
    for p in range(P):                       # output point
        for k in range(K):                   # tap
            p_src = (p + k - pad) % P        # circular source point
            wc = wc.at[p_src, :, p, :].add(w[:, :, k].T.astype(jnp.float32))
    return wc.reshape(P * c_in, P * d_out)


def _choose_block_n(n_rows, n_points, dim_latent, fixed_param_bytes,
                    working_set_budget_bytes):
    """Largest polygon tile (multiple of 8) whose f32 live set plus the
    (double-buffered) constant parameter buffers fits the budget."""
    P, D = n_points, dim_latent
    # per-row f32 live bytes: activations h/y plus double-buffered streaming
    # tiles (points in, exists in, output out).
    per_row = 4 * (3 * P * D + 2 * (2 * P) + 2 * 1 + 2 * D)
    avail = max(per_row * 8, working_set_budget_bytes - 2 * fixed_param_bytes)
    cap = max(8, (avail // per_row) // 8 * 8)
    cap = min(cap, 8192)                     # hard cap: never the whole array
    bn = min(cap, _round_up(n_rows, 8))
    # Prefer >= 2 grid blocks when there is enough work so the 'parallel' axis
    # can feed both v7x TensorCores; the ~0.35 us extra grid step is noise on
    # single-core v5e/v6e.
    if bn >= n_rows and n_rows >= 1024:
        bn = min(cap, _round_up(_round_up(n_rows, 2) // 2, 8))
    return max(8, bn)


def polygon_encoder(points, exists, conv_params, out_w, out_b, *,
                    kernel_size, dim_latent, use_bf16=True, block_n=None,
                    working_set_budget_bytes=12 * 1024 * 1024,
                    vmem_limit_bytes=32 * 1024 * 1024):
    """PolygonEncoder forward.

    points: [B, E, P, 2]; exists: [B, E]
    conv_params: list of (w [D, C_in, K], b [D]) in PyTorch Conv1d layout.
    out_w: [D, D], out_b: [D] in PyTorch Linear layout.
    Returns [B, E, D] float32.
    """
    B, E, P, two = points.shape
    assert two == 2
    D = dim_latent
    L = len(conv_params)
    assert L >= 1
    N = B * E
    mm_dtype = jnp.bfloat16 if use_bf16 else jnp.float32

    # ---- pack parameters (once, in the wrapper) -----------------------------
    w0 = None
    w_rest = []
    b_conv_rows = []
    for li, (w, b) in enumerate(conv_params):
        d_out, c_in, k_w = w.shape
        assert k_w == kernel_size and d_out == D
        wc = _pack_circulant(w, P).astype(mm_dtype)
        if li == 0:
            assert c_in == 2
            w0 = wc                                   # [2P, P*D]
        else:
            assert c_in == D
            w_rest.append(wc)                         # [P*D, P*D]
        b_conv_rows.append(jnp.tile(b.astype(jnp.float32), P).reshape(1, P * D))
    b_conv = jnp.stack(b_conv_rows, axis=0)           # [L, 1, P*D]
    w_rest = jnp.stack(w_rest, axis=0) if w_rest else None  # [L-1, P*D, P*D]
    w_head = jnp.tile(out_w.T.astype(jnp.float32), (P, 1)).astype(mm_dtype)
    b_head = out_b.reshape(1, D).astype(jnp.float32)

    fixed_bytes = sum(int(a.size) * a.dtype.itemsize
                      for a in ([w0, b_conv, w_head, b_head]
                                + ([w_rest] if w_rest is not None else [])))

    if block_n is None:
        block_n = _choose_block_n(N, P, D, fixed_bytes,
                                  working_set_budget_bytes)
    block_n = max(8, _round_up(block_n, 8))
    # Pad N up to a multiple of block_n (padded rows have exists == 0).
    N_pad = _round_up(max(N, block_n), block_n)

    pts = points.reshape(N, P * 2).astype(jnp.float32)  # point-major, xy-minor
    ex = exists.reshape(N, 1).astype(jnp.float32)
    if N_pad != N:
        pts = jnp.pad(pts, ((0, N_pad - N), (0, 0)))
        ex = jnp.pad(ex, ((0, N_pad - N), (0, 0)))

    in_specs = [
        pl.BlockSpec((block_n, 2 * P), lambda i: (i, 0)),   # raw points
        pl.BlockSpec((block_n, 1), lambda i: (i, 0)),       # exists mask
        pl.BlockSpec(w0.shape, lambda i: (0, 0)),           # layer-0 circulant
    ]
    args = [pts, ex, w0]
    if w_rest is not None:
        in_specs.append(pl.BlockSpec(w_rest.shape, lambda i: (0, 0, 0)))
        args.append(w_rest)
    in_specs += [
        pl.BlockSpec(b_conv.shape, lambda i: (0, 0, 0)),
        pl.BlockSpec(w_head.shape, lambda i: (0, 0)),
        pl.BlockSpec(b_head.shape, lambda i: (0, 0)),
    ]
    args += [b_conv, w_head, b_head]

    kernel = functools.partial(_polygon_encoder_kernel, L, P, D)
    out = pl.pallas_call(
        kernel,
        out_shape=jax.ShapeDtypeStruct((N_pad, D), jnp.float32),
        grid=(N_pad // block_n,),
        in_specs=in_specs,
        out_specs=pl.BlockSpec((block_n, D), lambda i: (i, 0)),
        compiler_params=pltpu.CompilerParams(
            dimension_semantics=("parallel",),
            vmem_limit_bytes=vmem_limit_bytes),
    )(*args)
    return out[:N].reshape(B, E, D)


# --------------------- pure-JAX reference (PyTorch semantics) ----------------
def _conv1d_circular_same(h, w, b):
    # h: [N, C_in, P] (torch NCW), w: [D, C_in, K], b: [D]
    D, _, K = w.shape
    pad = (K - 1) // 2
    out = jnp.zeros((h.shape[0], D, h.shape[-1]), jnp.float32)
    for k in range(K):
        shifted = jnp.roll(h, shift=pad - k, axis=-1)   # x[(t + k - pad) % P]
        out = out + jnp.einsum('nip,oi->nop', shifted, w[:, :, k])
    return out + b[None, :, None]


def ref_forward(points, exists, conv_params, out_w, out_b, dim_latent):
    B, E, P, _ = points.shape
    h = jnp.transpose(points, (0, 1, 3, 2)).reshape(B * E, 2, P)
    for (w, b) in conv_params:
        h = _conv1d_circular_same(h, w, b)
        h = jnp.where(h > 0, h, 0.01 * h)
    h = h.reshape(B, E, dim_latent, P).sum(-1)
    h = h * exists[..., None]
    return h @ out_w.T + out_b


if __name__ == "__main__":
    key = jax.random.PRNGKey(0)
    B, E, P = 2, 8, 8
    dim_latent = 32
    n_conv_layers = 2
    kernel_size = 3

    keys = jax.random.split(key, 2 + 2 * n_conv_layers + 2)
    points = jax.random.normal(keys[0], (B, E, P, 2), jnp.float32)
    exists = (jax.random.uniform(keys[1], (B, E)) > 0.3).astype(jnp.float32)

    # Deterministic synthetic parameters in PyTorch layouts.
    conv_params = []
    kk = 2
    in_ch = 2
    for _ in range(n_conv_layers):
        w = 0.1 * jax.random.normal(keys[kk], (dim_latent, in_ch, kernel_size),
                                    jnp.float32)
        b = 0.1 * jax.random.normal(keys[kk + 1], (dim_latent,), jnp.float32)
        conv_params.append((w, b))
        kk += 2
        in_ch = dim_latent
    out_w = 0.1 * jax.random.normal(keys[kk], (dim_latent, dim_latent),
                                    jnp.float32)
    out_b = 0.1 * jax.random.normal(keys[kk + 1], (dim_latent,), jnp.float32)

    ref = ref_forward(points, exists, conv_params, out_w, out_b, dim_latent)

    # f32 matmul path (tight correctness check)
    out_f32 = polygon_encoder(points, exists, conv_params, out_w, out_b,
                              kernel_size=kernel_size, dim_latent=dim_latent,
                              use_bf16=False)
    out_f32 = jax.block_until_ready(out_f32)
    assert out_f32.shape == (B, E, dim_latent)
    assert jnp.allclose(out_f32, ref, atol=1e-3, rtol=1e-3), "f32 kernel mismatch"

    # default path: all matmuls in bf16 (f32 accumulation on the MXU)
    out_bf16 = polygon_encoder(points, exists, conv_params, out_w, out_b,
                               kernel_size=kernel_size, dim_latent=dim_latent)
    out_bf16 = jax.block_until_ready(out_bf16)
    assert jnp.allclose(out_bf16, ref, atol=3e-2, rtol=3e-2), "bf16 kernel mismatch"

    print("KERNEL_OK")
</pallas_src>

<mosaic_0001>
module attributes {stable_mosaic.version = 11 : i64} {
  func.func @_polygon_encoder_kernel(%arg0: i32, %arg1: memref<16x16xf32, #tpu.memory_space<vmem>>, %arg2: memref<16x1xf32, #tpu.memory_space<vmem>>, %arg3: memref<16x256xf32, #tpu.memory_space<vmem>>, %arg4: memref<1x256x256xf32, #tpu.memory_space<vmem>>, %arg5: memref<2x1x256xf32, #tpu.memory_space<vmem>>, %arg6: memref<256x32xf32, #tpu.memory_space<vmem>>, %arg7: memref<1x32xf32, #tpu.memory_space<vmem>>, %arg8: memref<16x32xf32, #tpu.memory_space<vmem>>) attributes {dimension_semantics = [#tpu.dimension_semantics<parallel>], iteration_bounds = array<i64: 1>, scalar_prefetch = 0 : i64, scratch_operands = 0 : i64, tpu.core_type = #tpu.core_type<tc>, window_params = [{transform_indices = @transform_0, window_bounds = array<i64: 16, 16>}, {transform_indices = @transform_1, window_bounds = array<i64: 16, 1>}, {pipeline_mode = #tpu.pipeline_mode<synchronous>, transform_indices = @transform_2, window_bounds = array<i64: 16, 256>}, {pipeline_mode = #tpu.pipeline_mode<synchronous>, transform_indices = @transform_3, window_bounds = array<i64: 1, 256, 256>}, {pipeline_mode = #tpu.pipeline_mode<synchronous>, transform_indices = @transform_4, window_bounds = array<i64: 2, 1, 256>}, {pipeline_mode = #tpu.pipeline_mode<synchronous>, transform_indices = @transform_5, window_bounds = array<i64: 256, 32>}, {pipeline_mode = #tpu.pipeline_mode<synchronous>, transform_indices = @transform_6, window_bounds = array<i64: 1, 32>}, {transform_indices = @transform_7, window_bounds = array<i64: 16, 32>}]} {
    %c0 = arith.constant 0 : index
    %c0_0 = arith.constant 0 : index
    %0 = vector.load %arg3[%c0, %c0_0] : memref<16x256xf32, #tpu.memory_space<vmem>>, vector<16x256xf32>
    %c0_1 = arith.constant 0 : index
    %c0_2 = arith.constant 0 : index
    %1 = vector.load %arg1[%c0_1, %c0_2] : memref<16x16xf32, #tpu.memory_space<vmem>>, vector<16x16xf32>
    %cst = arith.constant dense<0.000000e+00> : vector<16x256xf32>
    %2 = tpu.matmul %1, %0, %cst {dimension_numbers = #tpu.dot_dimension_numbers<[1], [0], [0], [1], [0, 0, 1, 1], [], []>} : vector<16x16xf32>, vector<16x256xf32>, vector<16x256xf32> -> vector<16x256xf32>
    %c0_3 = arith.constant 0 : index
    %c0_4 = arith.constant 0 : index
    %c0_5 = arith.constant 0 : index
    %3 = vector.load %arg5[%c0_3, %c0_4, %c0_5] : memref<2x1x256xf32, #tpu.memory_space<vmem>>, vector<1x1x256xf32>
    %4 = vector.shape_cast %3 : vector<1x1x256xf32> to vector<1x256xf32>
    %5 = vector.broadcast %4 : vector<1x256xf32> to vector<16x256xf32>
    %6 = arith.addf %2, %5 : vector<16x256xf32>
    %cst_6 = arith.constant 0.00999999977 : f32
    %7 = vector.broadcast %cst_6 : f32 to vector<16x256xf32>
    %8 = arith.mulf %7, %6 : vector<16x256xf32>
    %9 = arith.maximumf %6, %8 : vector<16x256xf32>
    %c0_7 = arith.constant 0 : index
    %c0_8 = arith.constant 0 : index
    %c0_9 = arith.constant 0 : index
    %10 = vector.load %arg4[%c0_7, %c0_8, %c0_9] : memref<1x256x256xf32, #tpu.memory_space<vmem>>, vector<1x256x256xf32>
    %11 = vector.shape_cast %10 : vector<1x256x256xf32> to vector<256x256xf32>
    %cst_10 = arith.constant dense<0.000000e+00> : vector<16x256xf32>
    %12 = tpu.matmul %9, %11, %cst_10 {dimension_numbers = #tpu.dot_dimension_numbers<[1], [0], [0], [1], [0, 0, 1, 1], [], []>} : vector<16x256xf32>, vector<256x256xf32>, vector<16x256xf32> -> vector<16x256xf32>
    %c1 = arith.constant 1 : index
    %c0_11 = arith.constant 0 : index
    %c0_12 = arith.constant 0 : index
    %13 = vector.load %arg5[%c1, %c0_11, %c0_12] : memref<2x1x256xf32, #tpu.memory_space<vmem>>, vector<1x1x256xf32>
    %14 = vector.shape_cast %13 : vector<1x1x256xf32> to vector<1x256xf32>
    %15 = vector.broadcast %14 : vector<1x256xf32> to vector<16x256xf32>
    %16 = arith.addf %12, %15 : vector<16x256xf32>
    %cst_13 = arith.constant 0.00999999977 : f32
    %17 = vector.broadcast %cst_13 : f32 to vector<16x256xf32>
    %18 = arith.mulf %17, %16 : vector<16x256xf32>
    %19 = arith.maximumf %16, %18 : vector<16x256xf32>
    %c0_14 = arith.constant 0 : index
    %c0_15 = arith.constant 0 : index
    %20 = vector.load %arg6[%c0_14, %c0_15] : memref<256x32xf32, #tpu.memory_space<vmem>>, vector<256x32xf32>
    %cst_16 = arith.constant dense<0.000000e+00> : vector<16x32xf32>
    %21 = tpu.matmul %19, %20, %cst_16 {dimension_numbers = #tpu.dot_dimension_numbers<[1], [0], [0], [1], [0, 0, 1, 1], [], []>} : vector<16x256xf32>, vector<256x32xf32>, vector<16x32xf32> -> vector<16x32xf32>
    %c0_17 = arith.constant 0 : index
    %c0_18 = arith.constant 0 : index
    %22 = vector.load %arg2[%c0_17, %c0_18] : memref<16x1xf32, #tpu.memory_space<vmem>>, vector<16x1xf32>
    %23 = vector.broadcast %22 : vector<16x1xf32> to vector<16x32xf32>
    %24 = arith.mulf %21, %23 : vector<16x32xf32>
    %c0_19 = arith.constant 0 : index
    %c0_20 = arith.constant 0 : index
    %25 = vector.load %arg7[%c0_19, %c0_20] : memref<1x32xf32, #tpu.memory_space<vmem>>, vector<1x32xf32>
    %26 = vector.broadcast %25 : vector<1x32xf32> to vector<16x32xf32>
    %27 = arith.addf %24, %26 : vector<16x32xf32>
    %c0_21 = arith.constant 0 : index
    %c0_22 = arith.constant 0 : index
    %28 = vector.load %arg8[%c0_21, %c0_22] : memref<16x32xf32, #tpu.memory_space<vmem>>, vector<16x32xf32>
    tpu.vector_store %arg8[%c0_21, %c0_22], %27 {strides = array<i32>} : memref<16x32xf32, #tpu.memory_space<vmem>>, vector<16x32xf32>,
    return
  }
  func.func @transform_0(%arg0: i32) -> (i32, i32) {
    %c0_i32 = arith.constant 0 : i32
    %c0_i32_0 = arith.constant 0 : i32
    return %arg0, %c0_i32 : i32, i32
  }
  func.func @transform_1(%arg0: i32) -> (i32, i32) {
    %c0_i32 = arith.constant 0 : i32
    %c0_i32_0 = arith.constant 0 : i32
    return %arg0, %c0_i32 : i32, i32
  }
  func.func @transform_2(%arg0: i32) -> (i32, i32) {
    %c0_i32 = arith.constant 0 : i32
    %c0_i32_0 = arith.constant 0 : i32
    %c0_i32_1 = arith.constant 0 : i32
    return %c0_i32, %c0_i32_0 : i32, i32
  }
  func.func @transform_3(%arg0: i32) -> (i32, i32, i32) {
    %c0_i32 = arith.constant 0 : i32
    %c0_i32_0 = arith.constant 0 : i32
    %c0_i32_1 = arith.constant 0 : i32
    %c0_i32_2 = arith.constant 0 : i32
    return %c0_i32, %c0_i32_0, %c0_i32_1 : i32, i32, i32
  }
  func.func @transform_4(%arg0: i32) -> (i32, i32, i32) {
    %c0_i32 = arith.constant 0 : i32
    %c0_i32_0 = arith.constant 0 : i32
    %c0_i32_1 = arith.constant 0 : i32
    %c0_i32_2 = arith.constant 0 : i32
    return %c0_i32, %c0_i32_0, %c0_i32_1 : i32, i32, i32
  }
  func.func @transform_5(%arg0: i32) -> (i32, i32) {
    %c0_i32 = arith.constant 0 : i32
    %c0_i32_0 = arith.constant 0 : i32
    %c0_i32_1 = arith.constant 0 : i32
    return %c0_i32, %c0_i32_0 : i32, i32
  }
  func.func @transform_6(%arg0: i32) -> (i32, i32) {
    %c0_i32 = arith.constant 0 : i32
    %c0_i32_0 = arith.constant 0 : i32
    %c0_i32_1 = arith.constant 0 : i32
    return %c0_i32, %c0_i32_0 : i32, i32
  }
  func.func @transform_7(%arg0: i32) -> (i32, i32) {
    %c0_i32 = arith.constant 0 : i32
    %c0_i32_0 = arith.constant 0 : i32
    return %arg0, %c0_i32 : i32, i32
  }
}

</mosaic_0001>

<llo_original>
// kernel: tpu_custom_call.1
$region0: #{tpu_custom_call.1}
  #allocation0 [shape = 'u32[]', space=smem, size = 0x4, offset = 0x4, fixed_abs, tag = 'smem constant byte address 0x4 - core index']
  #allocation1 [shape = 'u32[144,128]{1,0:T(1,128)}', space=vmem, size = 0x12000, scoped, tag = 'internal scratch']
  %s0 = inlined_call_operand.vmem [shape: f32[16,16], index: 0, kind: input, shape index: {}]
  %s1 = inlined_call_operand.vmem [shape: f32[16,1], index: 1, kind: input, shape index: {}]
  %s2 = inlined_call_operand.vmem [shape: f32[16,256], index: 2, kind: input, shape index: {}]
  %s3 = inlined_call_operand.hbm [shape: f32[1,256,256], index: 3, kind: input, shape index: {}]
  %s4 = inlined_call_operand.vmem [shape: f32[2,1,256], index: 4, kind: input, shape index: {}]
  %s5 = inlined_call_operand.vmem [shape: f32[256,32], index: 5, kind: input, shape index: {}]
  %s6 = inlined_call_operand.vmem [shape: f32[1,32], index: 6, kind: input, shape index: {}]
  %s7 = inlined_call_operand.hbm [shape: f32[16,32], index: 7, kind: output, shape index: {}]
  %s8 = sld [smem:[#allocation0]]
  $region42: #{tpu_custom_call.1} parent=0
    _
  %s10 = ssub.s32 1, %s8
  %s11 = scalar_select 0, %s10, %s8
  $region1: #{tpu_custom_call.1} parent=0
    #allocation2 [shape = 'u8[262144]{0}', space=vmem, size = 0x40000, scoped, tag = 'input window, operand 3, single buffered']
    #allocation3 [shape = 's32[1]{0}', space=sflag, size = 0x4, scoped, tag = 'scoped memory for tpu_custom_call.1']
    #allocation4 [shape = 's32[1]{0}', space=sflag, size = 0x4, scoped, tag = 'scoped memory for tpu_custom_call.1']
    #allocation5 [shape = 'u8[8192]{0}', space=vmem, size = 0x2000, scoped, tag = 'output window, operand 0, single buffered']
    %12 = vsyncpa [#allocation3], 0
    %13 = vsyncpa [#allocation4], 0
    // Predicated region
    $region2: #{tpu_custom_call.1} parent=1 // pred_check
      _
    $region3: #{tpu_custom_call.1} parent=1 // pred_check_branch
      %15 = sbr.rel (0) target = $region5
    $region4: #{tpu_custom_call.1} parent=1 // pred_region
      _
    $region5: #{tpu_custom_call.1} parent=1 // pred_fallthru
      _
    // Predicated region
    $region6: #{tpu_custom_call.1} parent=1 // pred_check
      _
    $region7: #{tpu_custom_call.1} parent=1 // pred_check_branch
      %17 = sbr.rel (0) target = $region9
    $region8: #{tpu_custom_call.1} parent=1 // pred_region
      _
    $region9: #{tpu_custom_call.1} parent=1 // pred_fallthru
      _
    // Predicated region
    $region10: #{tpu_custom_call.1} parent=1 // pred_check
      _
    $region11: #{tpu_custom_call.1} parent=1 // pred_check_branch
      %19 = sbr.rel (0) target = $region13
    $region12: #{tpu_custom_call.1} parent=1 // pred_region
      _
    $region13: #{tpu_custom_call.1} parent=1 // pred_fallthru
      _
    // Predicated region
    $region14: #{tpu_custom_call.1} parent=1 // pred_check
      _
    $region15: #{tpu_custom_call.1} parent=1 // pred_check_branch
      %21 = sbr.rel (0) target = $region17
    $region16: #{tpu_custom_call.1} parent=1 // pred_region
      %s23 = ssub.s32 8192, 8192
      %24 = vsyncadd [#allocation3], %s23
      %s25 = sshll.u32 [#allocation2], 4
      %s26 = int_to_ptr.vmem [resolvable:$true] %s25
      %31 = dma.hbm_to_vmem [thread:$0]  %s3, 8192, %s26, [#allocation3], 256, 256, 16
    $region17: #{tpu_custom_call.1} parent=1 // pred_fallthru
      _
    // Predicated region
    $region18: #{tpu_custom_call.1} parent=1 // pred_check
      _
    $region19: #{tpu_custom_call.1} parent=1 // pred_check_branch
      %33 = sbr.rel (0) target = $region21
    $region20: #{tpu_custom_call.1} parent=1 // pred_region
      _
    $region21: #{tpu_custom_call.1} parent=1 // pred_fallthru
      _
    // Predicated region
    $region22: #{tpu_custom_call.1} parent=1 // pred_check
      _
    $region23: #{tpu_custom_call.1} parent=1 // pred_check_branch
      %35 = sbr.rel (0) target = $region25
    $region24: #{tpu_custom_call.1} parent=1 // pred_region
      _
    $region25: #{tpu_custom_call.1} parent=1 // pred_fallthru
      _
    // Predicated region
    $region26: #{tpu_custom_call.1} parent=1 // pred_check
      _
    $region27: #{tpu_custom_call.1} parent=1 // pred_check_branch
      %37 = sbr.rel (0) target = $region29
    $region28: #{tpu_custom_call.1} parent=1 // pred_region
      _
    $region29: #{tpu_custom_call.1} parent=1 // pred_fallthru
      _
    // Predicated region
    $region30: #{tpu_custom_call.1} parent=1 // pred_check
      _
    $region31: #{tpu_custom_call.1} parent=1 // pred_check_branch
      %39 = sbr.rel (0) target = $region33
    $region32: #{tpu_custom_call.1} parent=1 // pred_region
      %40 = dma.done [#allocation3], 8192
    $region33: #{tpu_custom_call.1} parent=1 // pred_fallthru
      _
    %v41 = vld [vmem:[%s2] sm:$0xff]
    %v42 = vld [vmem:[%s2 + $0x8] sm:$0xff]
    %v43 = vld [vmem:[%s2 + $0x10] sm:$0xff]
    %v44 = vld [vmem:[%s2 + $0x18] sm:$0xff]
    %v45 = vld [vmem:[%s0] sm:$0xff]
    %v46 = vld [vmem:[%s0 + $0x8] sm:$0xff]
    %v47 = vld [vmem:[%s4] sm:$0x3]
    %v49 = vlaneseq
    %v50 = vshrl.u32 %v49, 7
    %v51 = vsub.s32 0, %v50
    %v52 = vrot.slane %v47, %v51
    %v53 = vlaneseq
    %v54 = vshrl.u32 %v53, 7
    %v55 = vsub.s32 1, %v54
    %v56 = vrot.slane %v47, %v55
    %vm59 = vcmask 130048
    %v61 = vsel %vm59, %v45, 0
    %v64 = vsel %vm59, %v46, 0
    %66 = vmatprep.subr.mxu0 0.0
    %67 = vmatpush1.msra.mxu0 0.0
    %68 = vmatprep.subr.mxu0 0.0
    %69 = vmatpush1.msra.mxu0 0.0
    %70 = vmatprep.subr.mxu0 0.0
    %71 = vmatpush1.msra.mxu0 0.0
    %72 = vmatprep.subr.mxu0 0.0
    %73 = vmatpush1.msra.mxu0 0.0
    %74 = vmatprep.subr.mxu0 0.0
    %75 = vmatpush1.msra.mxu0 0.0
    %76 = vmatprep.subr.mxu0 0.0
    %77 = vmatpush1.msra.mxu0 0.0
    %78 = vmatprep.subr.mxu0 0.0
    %79 = vmatpush1.msra.mxu0 0.0
    %80 = vmatprep.subr.mxu0 0.0
    %81 = vmatpush1.msra.mxu0 0.0
    %82 = vmatprep.subr.mxu0 0.0
    %83 = vmatpush1.msra.mxu0 0.0
    %84 = vmatprep.subr.mxu0 0.0
    %85 = vmatpush1.msra.mxu0 0.0
    %86 = vmatprep.subr.mxu0 0.0
    %87 = vmatpush1.msra.mxu0 0.0
    %88 = vmatprep.subr.mxu0 0.0
    %89 = vmatpush1.msra.mxu0 0.0
    %90 = vmatprep.subr.mxu0 0.0
    %91 = vmatpush1.msra.mxu0 0.0
    %92 = vmatprep.subr.mxu0 0.0
    %93 = vmatpush1.msra.mxu0 0.0
    %94 = vmatprep.subr.mxu0 %v44
    %95 = vmatpush1.msra.mxu0 %v43
    %96 = vmatprep.subr.mxu0 %v42
    %97 = vmatpush1.msra.mxu0 %v41
    %98 = vmatprep.subr.mxu0 0.0
    %99 = vmatpush2.msra.mxu0 0.0
    %100 = vmatprep.subr.mxu0 0.0
    %101 = vmatpush2.msra.mxu0 0.0
    %102 = vmatprep.subr.mxu0 0.0
    %103 = vmatpush2.msra.mxu0 0.0
    %104 = vmatprep.subr.mxu0 0.0
    %105 = vmatpush2.msra.mxu0 0.0
    %106 = vmatprep.subr.mxu0 0.0
    %107 = vmatpush2.msra.mxu0 0.0
    %108 = vmatprep.subr.mxu0 0.0
    %109 = vmatpush2.msra.mxu0 0.0
    %110 = vmatprep.subr.mxu0 0.0
    %111 = vmatpush2.msra.mxu0 0.0
    %112 = vmatprep.subr.mxu0 0.0
    %113 = vmatpush2.msra.mxu0 0.0
    %114 = vmatprep.subr.mxu0 0.0
    %115 = vmatpush2.msra.mxu0 0.0
    %116 = vmatprep.subr.mxu0 0.0
    %117 = vmatpush2.msra.mxu0 0.0
    %118 = vmatprep.subr.mxu0 0.0
    %119 = vmatpush2.msra.mxu0 0.0
    %120 = vmatprep.subr.mxu0 0.0
    %121 = vmatpush2.msra.mxu0 0.0
    %122 = vmatprep.subr.mxu0 0.0
    %123 = vmatpush2.msra.mxu0 0.0
    %124 = vmatprep.subr.mxu0 0.0
    %125 = vmatpush2.msra.mxu0 0.0
    %126 = vmatprep.subr.mxu0 0.0
    %127 = vmatpush2.msra.mxu0 0.0
    %128 = vmatprep.subr.mxu0 0.0
    %129 = vmatpush2.msra.mxu0 0.0
    %130 = vmatprep.mubr.f32.mxu0 0.0
    %131 = vmatmul.mubr.f32.gmra.mxu0 %v61
    %v132 = vpop.f32.mrf.mxu0
    %v133 = vadd.f32 %v52, %v132
    %v134 = vpop.f32.mrf.mxu0
    %v135 = vadd.f32 %v56, %v134
    %136 = vmatprep.mubr.f32.mxu0 0.0
    %137 = vmatmul.mubr.f32.gmra.mxu0 %v64
    %v138 = vpop.f32.mrf.mxu0
    %v139 = vadd.f32 %v52, %v138
    %v140 = vpop.f32.mrf.mxu0
    %v141 = vadd.f32 %v56, %v140
    %142 = vdwg.mxu0
    %v143 = vmul.f32 %v133, 0.01
    %v144 = vmul.f32 %v135, 0.01
    %v145 = vmul.f32 %v139, 0.01
    %v146 = vmul.f32 %v141, 0.01
    %v147 = vmax.f32 %v133, %v143
    %v148 = vmax.f32 %v135, %v144
    %v149 = vmax.f32 %v139, %v145
    %v150 = vmax.f32 %v141, %v146
    %v151 = vld [vmem:[#allocation2] sm:$0xff]
    %v152 = vld [vmem:[#allocation2 + $0x8] sm:$0xff]
    %v153 = vld [vmem:[#allocation2 + $0x10] sm:$0xff]
    %v154 = vld [vmem:[#allocation2 + $0x18] sm:$0xff]
    %v155 = vld [vmem:[#allocation2 + $0x20] sm:$0xff]
    %v156 = vld [vmem:[#allocation2 + $0x28] sm:$0xff]
    %v157 = vld [vmem:[#allocation2 + $0x30] sm:$0xff]
    %v158 = vld [vmem:[#allocation2 + $0x38] sm:$0xff]
    %v159 = vld [vmem:[#allocation2 + $0x40] sm:$0xff]
    %v160 = vld [vmem:[#allocation2 + $0x48] sm:$0xff]
    %v161 = vld [vmem:[#allocation2 + $0x50] sm:$0xff]
    %v162 = vld [vmem:[#allocation2 + $0x58] sm:$0xff]
    %v163 = vld [vmem:[#allocation2 + $0x60] sm:$0xff]
    %v164 = vld [vmem:[#allocation2 + $0x68] sm:$0xff]
    %v165 = vld [vmem:[#allocation2 + $0x70] sm:$0xff]
    %v166 = vld [vmem:[#allocation2 + $0x78] sm:$0xff]
    %v167 = vld [vmem:[#allocation2 + $0x80] sm:$0xff]
    %v168 = vld [vmem:[#allocation2 + $0x88] sm:$0xff]
    %v169 = vld [vmem:[#allocation2 + $0x90] sm:$0xff]
    %v170 = vld [vmem:[#allocation2 + $0x98] sm:$0xff]
    %v171 = vld [vmem:[#allocation2 + $0xa0] sm:$0xff]
    %v172 = vld [vmem:[#allocation2 + $0xa8] sm:$0xff]
    %v173 = vld [vmem:[#allocation2 + $0xb0] sm:$0xff]
    %v174 = vld [vmem:[#allocation2 + $0xb8] sm:$0xff]
    %v175 = vld [vmem:[#allocation2 + $0xc0] sm:$0xff]
    %v176 = vld [vmem:[#allocation2 + $0xc8] sm:$0xff]
    %v177 = vld [vmem:[#allocation2 + $0xd0] sm:$0xff]
    %v178 = vld [vmem:[#allocation2 + $0xd8] sm:$0xff]
    %v179 = vld [vmem:[#allocation2 + $0xe0] sm:$0xff]
    %v180 = vld [vmem:[#allocation2 + $0xe8] sm:$0xff]
    %v181 = vld [vmem:[#allocation2 + $0xf0] sm:$0xff]
    %v182 = vld [vmem:[#allocation2 + $0xf8] sm:$0xff]
    %v183 = vld [vmem:[#allocation2 + $0x100] sm:$0xff]
    %v184 = vld [vmem:[#allocation2 + $0x108] sm:$0xff]
    %v185 = vld [vmem:[#allocation2 + $0x110] sm:$0xff]
    %v186 = vld [vmem:[#allocation2 + $0x118] sm:$0xff]
    %v187 = vld [vmem:[#allocation2 + $0x120] sm:$0xff]
    %v188 = vld [vmem:[#allocation2 + $0x128] sm:$0xff]
    %v189 = vld [vmem:[#allocation2 + $0x130] sm:$0xff]
    %v190 = vld [vmem:[#allocation2 + $0x138] sm:$0xff]
    %v191 = vld [vmem:[#allocation2 + $0x140] sm:$0xff]
    %v192 = vld [vmem:[#allocation2 + $0x148] sm:$0xff]
    %v193 = vld [vmem:[#allocation2 + $0x150] sm:$0xff]
    %v194 = vld [vmem:[#allocation2 + $0x158] sm:$0xff]
    %v195 = vld [vmem:[#allocation2 + $0x160] sm:$0xff]
    %v196 = vld [vmem:[#allocation2 + $0x168] sm:$0xff]
    %v197 = vld [vmem:[#allocation2 + $0x170] sm:$0xff]
    %v198 = vld [vmem:[#allocation2 + $0x178] sm:$0xff]
    %v199 = vld [vmem:[#allocation2 + $0x180] sm:$0xff]
    %v200 = vld [vmem:[#allocation2 + $0x188] sm:$0xff]
    %v201 = vld [vmem:[#allocation2 + $0x190] sm:$0xff]
    %v202 = vld [vmem:[#allocation2 + $0x198] sm:$0xff]
    %v203 = vld [vmem:[#allocation2 + $0x1a0] sm:$0xff]
    %v204 = vld [vmem:[#allocation2 + $0x1a8] sm:$0xff]
    %v205 = vld [vmem:[#allocation2 + $0x1b0] sm:$0xff]
    %v206 = vld [vmem:[#allocation2 + $0x1b8] sm:$0xff]
    %v207 = vld [vmem:[#allocation2 + $0x1c0] sm:$0xff]
    %v208 = vld [vmem:[#allocation2 + $0x1c8] sm:$0xff]
    %v209 = vld [vmem:[#allocation2 + $0x1d0] sm:$0xff]
    %v210 = vld [vmem:[#allocation2 + $0x1d8] sm:$0xff]
    %v211 = vld [vmem:[#allocation2 + $0x1e0] sm:$0xff]
    %v212 = vld [vmem:[#allocation2 + $0x1e8] sm:$0xff]
    %v213 = vld [vmem:[#allocation2 + $0x1f0] sm:$0xff]
    %v214 = vld [vmem:[#allocation2 + $0x1f8] sm:$0xff]
    %s215 = scalar_lea.vmem %s4, 2
    %v216 = vld [vmem:[%s215] sm:$0x3]
    %v218 = vlaneseq
    %v219 = vshrl.u32 %v218, 7
    %v220 = vsub.s32 0, %v219
    %v221 = vrot.slane %v216, %v220
    %v222 = vlaneseq
    %v223 = vshrl.u32 %v222, 7
    %v224 = vsub.s32 1, %v223
    %v225 = vrot.slane %v216, %v224
    %228 = vmatprep.subr.mxu0 %v182
    %229 = vmatpush1.msra.mxu0 %v181
    %230 = vmatprep.subr.mxu0 %v180
    %231 = vmatpush1.msra.mxu0 %v179
    %232 = vmatprep.subr.mxu0 %v178
    %233 = vmatpush1.msra.mxu0 %v177
    %234 = vmatprep.subr.mxu0 %v176
    %235 = vmatpush1.msra.mxu0 %v175
    %236 = vmatprep.subr.mxu0 %v174
    %237 = vmatpush1.msra.mxu0 %v173
    %238 = vmatprep.subr.mxu0 %v172
    %239 = vmatpush1.msra.mxu0 %v171
    %240 = vmatprep.subr.mxu0 %v170
    %241 = vmatpush1.msra.mxu0 %v169
    %242 = vmatprep.subr.mxu0 %v168
    %243 = vmatpush1.msra.mxu0 %v167
    %244 = vmatprep.subr.mxu0 %v166
    %245 = vmatpush1.msra.mxu0 %v165
    %246 = vmatprep.subr.mxu0 %v164
    %247 = vmatpush1.msra.mxu0 %v163
    %248 = vmatprep.subr.mxu0 %v162
    %249 = vmatpush1.msra.mxu0 %v161
    %250 = vmatprep.subr.mxu0 %v160
    %251 = vmatpush1.msra.mxu0 %v159
    %252 = vmatprep.subr.mxu0 %v158
    %253 = vmatpush1.msra.mxu0 %v157
    %254 = vmatprep.subr.mxu0 %v156
    %255 = vmatpush1.msra.mxu0 %v155
    %256 = vmatprep.subr.mxu0 %v154
    %257 = vmatpush1.msra.mxu0 %v153
    %258 = vmatprep.subr.mxu0 %v152
    %259 = vmatpush1.msra.mxu0 %v151
    %260 = vmatprep.subr.mxu0 %v214
    %261 = vmatpush2.msra.mxu0 %v213
    %262 = vmatprep.subr.mxu0 %v212
    %263 = vmatpush2.msra.mxu0 %v211
    %264 = vmatprep.subr.mxu0 %v210
    %265 = vmatpush2.msra.mxu0 %v209
    %266 = vmatprep.subr.mxu0 %v208
    %267 = vmatpush2.msra.mxu0 %v207
    %268 = vmatprep.subr.mxu0 %v206
    %269 = vmatpush2.msra.mxu0 %v205
    %270 = vmatprep.subr.mxu0 %v204
    %271 = vmatpush2.msra.mxu0 %v203
    %272 = vmatprep.subr.mxu0 %v202
    %273 = vmatpush2.msra.mxu0 %v201
    %274 = vmatprep.subr.mxu0 %v200
    %275 = vmatpush2.msra.mxu0 %v199
    %276 = vmatprep.subr.mxu0 %v198
    %277 = vmatpush2.msra.mxu0 %v197
    %278 = vmatprep.subr.mxu0 %v196
    %279 = vmatpush2.msra.mxu0 %v195
    %280 = vmatprep.subr.mxu0 %v194
    %281 = vmatpush2.msra.mxu0 %v193
    %282 = vmatprep.subr.mxu0 %v192
    %283 = vmatpush2.msra.mxu0 %v191
    %284 = vmatprep.subr.mxu0 %v190
    %285 = vmatpush2.msra.mxu0 %v189
    %286 = vmatprep.subr.mxu0 %v188
    %287 = vmatpush2.msra.mxu0 %v187
    %288 = vmatprep.subr.mxu0 %v186
    %289 = vmatpush2.msra.mxu0 %v185
    %290 = vmatprep.subr.mxu0 %v184
    %291 = vmatpush2.msra.mxu0 %v183
    %292 = vmatprep.mubr.f32.mxu0 %v148
    %293 = vmatmul.mubr.f32.gmra.mxu0 %v147
    %v294 = vpop.f32.mrf.mxu0
    %v295 = vadd.f32 %v221, %v294
    %v296 = vpop.f32.mrf.mxu0
    %v297 = vadd.f32 %v225, %v296
    %298 = vmatprep.mubr.f32.mxu0 %v150
    %299 = vmatmul.mubr.f32.gmra.mxu0 %v149
    %v300 = vpop.f32.mrf.mxu0
    %v301 = vadd.f32 %v221, %v300
    %v302 = vpop.f32.mrf.mxu0
    %v303 = vadd.f32 %v225, %v302
    %304 = vdwg.mxu0
    %v305 = vmul.f32 %v295, 0.01
    %v306 = vmul.f32 %v297, 0.01
    %v307 = vmul.f32 %v301, 0.01
    %v308 = vmul.f32 %v303, 0.01
    %v309 = vmax.f32 %v295, %v305
    %v310 = vmax.f32 %v297, %v306
    %v311 = vmax.f32 %v301, %v307
    %v312 = vmax.f32 %v303, %v308
    %v313 = vld [vmem:[%s5] sm:$0xff]
    %v314 = vld [vmem:[%s5 + $0x8] sm:$0xff]
    %v315 = vld [vmem:[%s5 + $0x10] sm:$0xff]
    %v316 = vld [vmem:[%s5 + $0x18] sm:$0xff]
    %v317 = vld [vmem:[%s5 + $0x20] sm:$0xff]
    %v318 = vld [vmem:[%s5 + $0x28] sm:$0xff]
    %v319 = vld [vmem:[%s5 + $0x30] sm:$0xff]
    %v320 = vld [vmem:[%s5 + $0x38] sm:$0xff]
    %v321 = vld [vmem:[%s5 + $0x40] sm:$0xff]
    %v322 = vld [vmem:[%s5 + $0x48] sm:$0xff]
    %v323 = vld [vmem:[%s5 + $0x50] sm:$0xff]
    %v324 = vld [vmem:[%s5 + $0x58] sm:$0xff]
    %v325 = vld [vmem:[%s5 + $0x60] sm:$0xff]
    %v326 = vld [vmem:[%s5 + $0x68] sm:$0xff]
    %v327 = vld [vmem:[%s5 + $0x70] sm:$0xff]
    %v328 = vld [vmem:[%s5 + $0x78] sm:$0xff]
    %v329 = vld [vmem:[%s5 + $0x80] sm:$0xff]
    %v330 = vld [vmem:[%s5 + $0x88] sm:$0xff]
    %v331 = vld [vmem:[%s5 + $0x90] sm:$0xff]
    %v332 = vld [vmem:[%s5 + $0x98] sm:$0xff]
    %v333 = vld [vmem:[%s5 + $0xa0] sm:$0xff]
    %v334 = vld [vmem:[%s5 + $0xa8] sm:$0xff]
    %v335 = vld [vmem:[%s5 + $0xb0] sm:$0xff]
    %v336 = vld [vmem:[%s5 + $0xb8] sm:$0xff]
    %v337 = vld [vmem:[%s5 + $0xc0] sm:$0xff]
    %v338 = vld [vmem:[%s5 + $0xc8] sm:$0xff]
    %v339 = vld [vmem:[%s5 + $0xd0] sm:$0xff]
    %v340 = vld [vmem:[%s5 + $0xd8] sm:$0xff]
    %v341 = vld [vmem:[%s5 + $0xe0] sm:$0xff]
    %v342 = vld [vmem:[%s5 + $0xe8] sm:$0xff]
    %v343 = vld [vmem:[%s5 + $0xf0] sm:$0xff]
    %v344 = vld [vmem:[%s5 + $0xf8] sm:$0xff]
    %345 = vmatprep.subr.mxu0 0.0
    %346 = vmatpush1.msra.mxu0 %v328
    %347 = vmatprep.subr.mxu0 0.0
    %348 = vmatpush1.msra.mxu0 %v327
    %349 = vmatprep.subr.mxu0 0.0
    %350 = vmatpush1.msra.mxu0 %v326
    %351 = vmatprep.subr.mxu0 0.0
    %352 = vmatpush1.msra.mxu0 %v325
    %353 = vmatprep.subr.mxu0 0.0
    %354 = vmatpush1.msra.mxu0 %v324
    %355 = vmatprep.subr.mxu0 0.0
    %356 = vmatpush1.msra.mxu0 %v323
    %357 = vmatprep.subr.mxu0 0.0
    %358 = vmatpush1.msra.mxu0 %v322
    %359 = vmatprep.subr.mxu0 0.0
    %360 = vmatpush1.msra.mxu0 %v321
    %361 = vmatprep.subr.mxu0 0.0
    %362 = vmatpush1.msra.mxu0 %v320
    %363 = vmatprep.subr.mxu0 0.0
    %364 = vmatpush1.msra.mxu0 %v319
    %365 = vmatprep.subr.mxu0 0.0
    %366 = vmatpush1.msra.mxu0 %v318
    %367 = vmatprep.subr.mxu0 0.0
    %368 = vmatpush1.msra.mxu0 %v317
    %369 = vmatprep.subr.mxu0 0.0
    %370 = vmatpush1.msra.mxu0 %v316
    %371 = vmatprep.subr.mxu0 0.0
    %372 = vmatpush1.msra.mxu0 %v315
    %373 = vmatprep.subr.mxu0 0.0
    %374 = vmatpush1.msra.mxu0 %v314
    %375 = vmatprep.subr.mxu0 0.0
    %376 = vmatpush1.msra.mxu0 %v313
    %377 = vmatprep.subr.mxu0 0.0
    %378 = vmatpush2.msra.mxu0 %v344
    %379 = vmatprep.subr.mxu0 0.0
    %380 = vmatpush2.msra.mxu0 %v343
    %381 = vmatprep.subr.mxu0 0.0
    %382 = vmatpush2.msra.mxu0 %v342
    %383 = vmatprep.subr.mxu0 0.0
    %384 = vmatpush2.msra.mxu0 %v341
    %385 = vmatprep.subr.mxu0 0.0
    %386 = vmatpush2.msra.mxu0 %v340
    %387 = vmatprep.subr.mxu0 0.0
    %388 = vmatpush2.msra.mxu0 %v339
    %389 = vmatprep.subr.mxu0 0.0
    %390 = vmatpush2.msra.mxu0 %v338
    %391 = vmatprep.subr.mxu0 0.0
    %392 = vmatpush2.msra.mxu0 %v337
    %393 = vmatprep.subr.mxu0 0.0
    %394 = vmatpush2.msra.mxu0 %v336
    %395 = vmatprep.subr.mxu0 0.0
    %396 = vmatpush2.msra.mxu0 %v335
    %397 = vmatprep.subr.mxu0 0.0
    %398 = vmatpush2.msra.mxu0 %v334
    %399 = vmatprep.subr.mxu0 0.0
    %400 = vmatpush2.msra.mxu0 %v333
    %401 = vmatprep.subr.mxu0 0.0
    %402 = vmatpush2.msra.mxu0 %v332
    %403 = vmatprep.subr.mxu0 0.0
    %404 = vmatpush2.msra.mxu0 %v331
    %405 = vmatprep.subr.mxu0 0.0
    %406 = vmatpush2.msra.mxu0 %v330
    %407 = vmatprep.subr.mxu0 0.0
    %408 = vmatpush2.msra.mxu0 %v329
    %409 = vmatprep.mubr.f32.mxu0 %v310
    %410 = vmatmul.mubr.f32.gmra.mxu0 %v309
    %v411 = vpop.f32.mrf.mxu0
    %v412 = vadd.f32 0.0, %v411
    %v413 = vpop.f32.mrf.mxu0
    %414 = vmatprep.mubr.f32.mxu0 %v312
    %415 = vmatmul.mubr.f32.gmra.mxu0 %v311
    %v416 = vpop.f32.mrf.mxu0
    %v417 = vadd.f32 0.0, %v416
    %v418 = vpop.f32.mrf.mxu0
    %419 = vdwg.mxu0
    %v420 = vld [vmem:[%s1] sm:$0xff]
    %v421 = vld [vmem:[%s1 + $0x8] sm:$0xff]
    %423 = vset.pattern.permute.xlu0 0
    %424 = vperm.xlu0 %423, %v420
    %v425 = vpop.permute.xlu0 %424
    %428 = vset.pattern.permute.xlu0 0
    %429 = vperm.xlu0 %428, %v421
    %v430 = vpop.permute.xlu0 %429
    %v432 = vmul.f32 %v412, %v425
    %v433 = vmul.f32 %v417, %v430
    %v434 = vld [vmem:[%s6] sm:$0x1]
    %v436 = vlaneseq
    %v437 = vshrl.u32 %v436, 7
    %v438 = vsub.s32 0, %v437
    %v439 = vrot.slane %v434, %v438
    %v441 = vadd.f32 %v432, %v439
    %v442 = vadd.f32 %v433, %v439
    %vm443 = vcmask 261120
    %444 = vst.msk [vmem:[#allocation5] sm:$0xff] %vm443, %v441
    %445 = vst.msk [vmem:[#allocation5 + $0x8] sm:$0xff] %vm443, %v442
    // Predicated region
    $region34: #{tpu_custom_call.1} parent=1 // pred_check
      _
    $region35: #{tpu_custom_call.1} parent=1 // pred_check_branch
      %447 = sbr.rel (0) target = $region37
    $region36: #{tpu_custom_call.1} parent=1 // pred_region
      %s449 = ssub.s32 256, 256
      %450 = vsyncadd [#allocation4], %s449
      %s451 = sshll.u32 [#allocation5], 4
      %s452 = int_to_ptr.vmem [resolvable:$true] %s451
      %457 = dma.vmem_to_hbm [thread:$0]  %s452, 256, %s7, [#allocation4], 128, 128, 8
    $region37: #{tpu_custom_call.1} parent=1 // pred_fallthru
      _
    // Predicated region
    $region38: #{tpu_custom_call.1} parent=1 // pred_check
      _
    $region39: #{tpu_custom_call.1} parent=1 // pred_check_branch
      %459 = sbr.rel (0) target = $region41
    $region40: #{tpu_custom_call.1} parent=1 // pred_region
      %460 = dma.done [#allocation4], 256
    $region41: #{tpu_custom_call.1} parent=1 // pred_fallthru
      _
    %461 = vsyncpa [#allocation3], 1
    %462 = vsyncpa [#allocation4], 1

</llo_original>
